<compile_context>
chip_gen: v7x
topology: tpu7x:2x2x1
jax: 0.10.0
libtpu: 0.0.40
codegen_flags: <defaults>
</compile_context>

<pallas_src>
import functools

import jax
import jax.numpy as jnp
from jax import lax
from jax.experimental import pallas as pl
from jax.experimental.pallas import tpu as pltpu


def _interp_matrix(n_out: int, n_in: int, dtype=jnp.float32):
    """Row-stochastic matrix M (n_out, n_in) s.t. y = M @ x is 1-D linear
    interpolation with align_corners=True (matches F.interpolate bilinear)."""
    if n_out == 1:
        coord = jnp.zeros((1,), dtype=jnp.float32)
    else:
        coord = jnp.arange(n_out, dtype=jnp.float32) * ((n_in - 1) / (n_out - 1))
    i0 = jnp.clip(jnp.floor(coord).astype(jnp.int32), 0, n_in - 1)
    i1 = jnp.minimum(i0 + 1, n_in - 1)
    frac = coord - i0.astype(jnp.float32)
    cols = jnp.arange(n_in, dtype=jnp.int32)
    m = (cols[None, :] == i0[:, None]).astype(jnp.float32) * (1.0 - frac)[:, None]
    m = m + (cols[None, :] == i1[:, None]).astype(jnp.float32) * frac[:, None]
    return m.astype(dtype)


def _mxu_cost(m, k, n):
    """Crude MXU-pass cost: M rounded to sublane (8), K/N to lane tile (128)."""
    rup = lambda v, t: ((v + t - 1) // t) * t
    return rup(m, 8) * rup(k, 128) * rup(n, 128)


def _vmem_capacity_bytes():
    """Generation-aware VMEM capacity; conservative 64 MiB (v7x) fallback."""
    try:
        info = pltpu.get_tpu_info()
        cap = getattr(info, "vmem_capacity_bytes", None)
        if cap:
            return int(cap)
    except Exception:
        pass
    return 64 * 1024 * 1024


def _pick_blocks(N, C, H, W, H_out, W_out_pad, x_bytes, out_bytes, cdt_bytes,
                 vmem_cap):
    """Pick (batch_block, channel_block) so double-buffered blocks + scratch fit
    ~35% of VMEM, the parallel batch axis keeps >=2-4 grid steps, and per-step
    HBM traffic is large enough to hide the ~0.35us per-step overhead."""
    budget = int(0.35 * vmem_cap)
    fixed = 2 * (H_out * H + W * W_out_pad) * cdt_bytes       # interp matrices (dbl-buf)
    out_blk = H_out * W_out_pad * out_bytes
    acc_blk = H * W * 4                                        # f32 accumulator scratch

    def need(nb, cb):
        return (2 * nb * cb * H * W * x_bytes                  # x block, double buffered
                + 2 * nb * out_blk                             # out block, double buffered
                + nb * acc_blk + fixed)

    # Largest channel block that fits with a single-sample batch block.
    cb = 1
    for d in range(C, 0, -1):
        if C % d == 0 and need(1, d) <= budget:
            cb = d
            break

    # Smallest batch block reaching ~2 MiB per step, capped to keep >=2-4
    # parallel grid steps; fall back to the largest fitting divisor.
    cap = max(1, N // 4) if N >= 4 else 1
    target = 2 << 20
    nb = 1
    for d in range(1, N + 1):
        if N % d or d > cap or need(d, cb) > budget:
            continue
        nb = d
        if d * (cb * H * W * x_bytes + out_blk) >= target:
            break
    return nb, cb


def _score_kernel(w_ref, b_ref, x_ref, mh_ref, mwt_ref, o_ref, s_acc,
                  *, compute_dtype, rows_first):
    # w_ref:   (C,)  SMEM   1x1-conv weight (scalar reads)
    # b_ref:   (1,)  SMEM   bias
    # x_ref:   (nb, cb, H, W)  VMEM input block (native dtype, e.g. bf16)
    # mh_ref:  (H_out, H)      row-interp matrix  (compute dtype)
    # mwt_ref: (W, W_out_pad)  col-interp matrix^T, lane-padded (compute dtype)
    # o_ref:   (nb, H_out, W_out_pad)  output block (resident across channel axis)
    # s_acc:   (nb, H, W) f32  conv accumulator scratch
    nb, cb, H, W = x_ref.shape
    c_idx = pl.program_id(1)
    n_cblk = pl.num_programs(1)

    @pl.when(c_idx == 0)
    def _init():
        s_acc[...] = jnp.zeros_like(s_acc)

    c0 = c_idx * cb

    # Channel reduction for this channel block: one (nb, H, W) slab live at a
    # time, accumulated into VMEM scratch in f32.
    if cb <= 32:
        for j in range(cb):                       # small static unroll
            s_acc[...] += x_ref[:, j].astype(jnp.float32) * w_ref[c0 + j]
    else:
        def cbody(j, carry):                      # bounded live ranges for large C
            s_acc[...] += x_ref[:, j].astype(jnp.float32) * w_ref[c0 + j]
            return carry
        lax.fori_loop(0, cb, cbody, 0)

    @pl.when(c_idx == n_cblk - 1)
    def _finalize():
        mh = mh_ref[...]                          # hoisted: shared across samples
        mwt = mwt_ref[...]
        bias = b_ref[0]

        def nbody(n, carry):
            # Bias before the resize is valid: interp matrices are row-stochastic.
            s_n = (s_acc[n] + bias).astype(compute_dtype)                   # (H, W)
            if rows_first:
                t = jnp.dot(mh, s_n, preferred_element_type=jnp.float32)    # (H_out, W)
                o_n = jnp.dot(t.astype(compute_dtype), mwt,
                              preferred_element_type=jnp.float32)           # (H_out, Wp)
            else:
                t = jnp.dot(s_n, mwt, preferred_element_type=jnp.float32)   # (H, Wp)
                o_n = jnp.dot(mh, t.astype(compute_dtype),
                              preferred_element_type=jnp.float32)           # (H_out, Wp)
            o_ref[n] = o_n.astype(o_ref.dtype)
            return carry

        lax.fori_loop(0, nb, nbody, 0)


def score_layer(x, weight, bias, out_hw, *, compute_dtype=None,
                batch_block=None, channel_block=None):
    """x: (N, C, H, W); weight: (1, C, 1, 1); bias: (1,); out_hw: (H_out, W_out).
    Returns (N, 1, H_out, W_out) in x.dtype."""
    N, C, H, W = x.shape
    H_out, W_out = out_hw
    W_out_pad = ((W_out + 127) // 128) * 128       # lane-dense output stores

    if compute_dtype is None:
        compute_dtype = jnp.bfloat16 if x.dtype == jnp.bfloat16 else jnp.float32
    out_dtype = x.dtype

    w = weight.reshape(C).astype(jnp.float32)
    b = bias.reshape(1).astype(jnp.float32)
    mh = _interp_matrix(H_out, H).astype(compute_dtype)                      # (H_out, H)
    mwt = jnp.zeros((W, W_out_pad), jnp.float32)
    mwt = mwt.at[:, :W_out].set(_interp_matrix(W_out, W).T).astype(compute_dtype)

    vmem_cap = _vmem_capacity_bytes()
    nb, cb = _pick_blocks(N, C, H, W, H_out, W_out_pad,
                          x_bytes=x.dtype.itemsize,
                          out_bytes=jnp.dtype(out_dtype).itemsize,
                          cdt_bytes=jnp.dtype(compute_dtype).itemsize,
                          vmem_cap=vmem_cap)
    if batch_block is not None:
        nb = batch_block
    if channel_block is not None:
        cb = channel_block
    assert N % nb == 0 and C % cb == 0

    # MXU-aware (padded-pass) cost for the matmul ordering decision.
    rows_first = (_mxu_cost(H_out, H, W) + _mxu_cost(H_out, W, W_out_pad)
                  < _mxu_cost(H, W, W_out_pad) + _mxu_cost(H_out, H, W_out_pad))

    kernel = functools.partial(_score_kernel, compute_dtype=compute_dtype,
                               rows_first=rows_first)

    out_pad = pl.pallas_call(
        kernel,
        out_shape=jax.ShapeDtypeStruct((N, H_out, W_out_pad), out_dtype),
        grid_spec=pltpu.PrefetchScalarGridSpec(
            num_scalar_prefetch=2,                 # w, b -> SMEM scalars
            grid=(N // nb, C // cb),
            in_specs=[
                pl.BlockSpec((nb, cb, H, W), lambda i, c, *_: (i, c, 0, 0)),
                pl.BlockSpec((H_out, H), lambda i, c, *_: (0, 0)),
                pl.BlockSpec((W, W_out_pad), lambda i, c, *_: (0, 0)),
            ],
            out_specs=pl.BlockSpec((nb, H_out, W_out_pad),
                                   lambda i, c, *_: (i, 0, 0)),
            scratch_shapes=[pltpu.VMEM((nb, H, W), jnp.float32)],
        ),
        compiler_params=pltpu.CompilerParams(
            dimension_semantics=("parallel", "arbitrary"),
            vmem_limit_bytes=int(0.85 * vmem_cap),
        ),
    )(w, b, x, mh, mwt)

    out = out_pad[:, None]
    if W_out_pad != W_out:
        # TODO(synk): let downstream consume the lane-padded layout to avoid this
        # extra XLA slice pass when W_out % 128 != 0.
        out = out[..., :W_out]
    return out


def _reference(x, weight, bias, out_hw):
    """Pure-JAX f32 reference using the same separable formulation."""
    N, C, H, W = x.shape
    H_out, W_out = out_hw
    xf = x.astype(jnp.float32)
    s = jnp.einsum("nchw,c->nhw", xf, weight.reshape(C).astype(jnp.float32))
    s = s + bias.reshape(()).astype(jnp.float32)
    mh = _interp_matrix(H_out, H)
    mw = _interp_matrix(W_out, W)
    out = jnp.einsum("oh,nhw,pw->nop", mh, s, mw)
    return out[:, None]


if __name__ == "__main__":
    key = jax.random.PRNGKey(0)
    k_x, k_w, k_b = jax.random.split(key, 3)

    N, C, H, W = 2, 4, 16, 16
    H_out, W_out = 32, 32            # x_size[2:] of the original (pre-downsample) image

    x = jax.random.normal(k_x, (N, C, H, W), dtype=jnp.float32)
    weight = jax.random.normal(k_w, (1, C, 1, 1), dtype=jnp.float32) * 0.1
    bias = jax.random.normal(k_b, (1,), dtype=jnp.float32) * 0.1

    # f32 path (exact semantics, tight tolerance).
    out = score_layer(x, weight, bias, (H_out, W_out))
    out = jax.block_until_ready(out)
    ref = _reference(x, weight, bias, (H_out, W_out))
    assert out.shape == (N, 1, H_out, W_out)
    assert jnp.allclose(out.astype(jnp.float32), ref, rtol=1e-5, atol=1e-5)

    # bf16 path (no wrapper upcast; bf16 MXU operands, f32 accumulation).
    x_bf = x.astype(jnp.bfloat16)
    out_bf = score_layer(x_bf, weight, bias, (H_out, W_out))
    out_bf = jax.block_until_ready(out_bf)
    ref_bf = _reference(x_bf.astype(jnp.float32), weight, bias, (H_out, W_out))
    assert out_bf.shape == (N, 1, H_out, W_out)
    assert out_bf.dtype == jnp.bfloat16
    assert jnp.allclose(out_bf.astype(jnp.float32), ref_bf, rtol=5e-2, atol=2e-2)

    print("KERNEL_OK")
</pallas_src>

<mosaic_0001>
module attributes {stable_mosaic.version = 11 : i64} {
  func.func @_score_kernel(%arg0: i32, %arg1: i32, %arg2: memref<4xf32, #tpu.memory_space<smem>>, %arg3: memref<1xf32, #tpu.memory_space<smem>>, %arg4: memref<1x4x16x16xf32, #tpu.memory_space<vmem>>, %arg5: memref<32x16xf32, #tpu.memory_space<vmem>>, %arg6: memref<16x128xf32, #tpu.memory_space<vmem>>, %arg7: memref<1x32x128xf32, #tpu.memory_space<vmem>>, %arg8: memref<1x16x16xf32, #tpu.memory_space<vmem>>) attributes {dimension_semantics = [#tpu.dimension_semantics<parallel>, #tpu.dimension_semantics<arbitrary>], iteration_bounds = array<i64: 2, 1>, scalar_prefetch = 2 : i64, scratch_operands = 1 : i64, tpu.core_type = #tpu.core_type<tc>, window_params = [{transform_indices = @transform_0, window_bounds = array<i64: 1, 4, 16, 16>}, {pipeline_mode = #tpu.pipeline_mode<synchronous>, transform_indices = @transform_1, window_bounds = array<i64: 32, 16>}, {pipeline_mode = #tpu.pipeline_mode<synchronous>, transform_indices = @transform_2, window_bounds = array<i64: 16, 128>}, {transform_indices = @transform_3, window_bounds = array<i64: 1, 32, 128>}]} {
    %c0_i32 = arith.constant 0 : i32
    %0 = arith.cmpi eq, %arg1, %c0_i32 : i32
    %1 = arith.extui %0 : i1 to i32
    %c0_i32_0 = arith.constant 0 : i32
    %2 = arith.cmpi ne, %1, %c0_i32_0 : i32
    scf.if %2 {
      %cst = arith.constant 0.000000e+00 : f32
      %47 = vector.broadcast %cst : f32 to vector<1x16x16xf32>
      %c0_40 = arith.constant 0 : index
      %c0_41 = arith.constant 0 : index
      %c0_42 = arith.constant 0 : index
      %48 = vector.load %arg8[%c0_40, %c0_41, %c0_42] : memref<1x16x16xf32, #tpu.memory_space<vmem>>, vector<1x16x16xf32>
      tpu.vector_store %arg8[%c0_40, %c0_41, %c0_42], %47 {strides = array<i32>} : memref<1x16x16xf32, #tpu.memory_space<vmem>>, vector<1x16x16xf32>,
    } else {
    }
    %c4_i32 = arith.constant 4 : i32
    %3 = arith.muli %arg1, %c4_i32 : i32
    %c0 = arith.constant 0 : index
    %c0_1 = arith.constant 0 : index
    %c0_2 = arith.constant 0 : index
    %4 = vector.load %arg8[%c0, %c0_1, %c0_2] : memref<1x16x16xf32, #tpu.memory_space<vmem>>, vector<1x16x16xf32>
    %c0_3 = arith.constant 0 : index
    %c0_4 = arith.constant 0 : index
    %c0_5 = arith.constant 0 : index
    %c0_6 = arith.constant 0 : index
    %5 = vector.load %arg4[%c0_3, %c0_4, %c0_5, %c0_6] : memref<1x4x16x16xf32, #tpu.memory_space<vmem>>, vector<1x1x16x16xf32>
    %6 = vector.shape_cast %5 : vector<1x1x16x16xf32> to vector<1x16x16xf32>
    %c0_i32_7 = arith.constant 0 : i32
    %7 = arith.addi %3, %c0_i32_7 : i32
    %8 = arith.index_cast %7 : i32 to index
    %9 = memref.load %arg2[%8] : memref<4xf32, #tpu.memory_space<smem>>
    %10 = vector.broadcast %9 : f32 to vector<1x16x16xf32>
    %11 = arith.mulf %6, %10 : vector<1x16x16xf32>
    %12 = arith.addf %4, %11 : vector<1x16x16xf32>
    %c0_8 = arith.constant 0 : index
    %c0_9 = arith.constant 0 : index
    %c0_10 = arith.constant 0 : index
    %13 = vector.load %arg8[%c0_8, %c0_9, %c0_10] : memref<1x16x16xf32, #tpu.memory_space<vmem>>, vector<1x16x16xf32>
    tpu.vector_store %arg8[%c0_8, %c0_9, %c0_10], %12 {strides = array<i32>} : memref<1x16x16xf32, #tpu.memory_space<vmem>>, vector<1x16x16xf32>,
    %c0_11 = arith.constant 0 : index
    %c0_12 = arith.constant 0 : index
    %c0_13 = arith.constant 0 : index
    %14 = vector.load %arg8[%c0_11, %c0_12, %c0_13] : memref<1x16x16xf32, #tpu.memory_space<vmem>>, vector<1x16x16xf32>
    %c0_14 = arith.constant 0 : index
    %c1 = arith.constant 1 : index
    %c0_15 = arith.constant 0 : index
    %c0_16 = arith.constant 0 : index
    %15 = vector.load %arg4[%c0_14, %c1, %c0_15, %c0_16] : memref<1x4x16x16xf32, #tpu.memory_space<vmem>>, vector<1x1x16x16xf32>
    %16 = vector.shape_cast %15 : vector<1x1x16x16xf32> to vector<1x16x16xf32>
    %c1_i32 = arith.constant 1 : i32
    %17 = arith.addi %3, %c1_i32 : i32
    %18 = arith.index_cast %17 : i32 to index
    %19 = memref.load %arg2[%18] : memref<4xf32, #tpu.memory_space<smem>>
    %20 = vector.broadcast %19 : f32 to vector<1x16x16xf32>
    %21 = arith.mulf %16, %20 : vector<1x16x16xf32>
    %22 = arith.addf %14, %21 : vector<1x16x16xf32>
    %c0_17 = arith.constant 0 : index
    %c0_18 = arith.constant 0 : index
    %c0_19 = arith.constant 0 : index
    %23 = vector.load %arg8[%c0_17, %c0_18, %c0_19] : memref<1x16x16xf32, #tpu.memory_space<vmem>>, vector<1x16x16xf32>
    tpu.vector_store %arg8[%c0_17, %c0_18, %c0_19], %22 {strides = array<i32>} : memref<1x16x16xf32, #tpu.memory_space<vmem>>, vector<1x16x16xf32>,
    %c0_20 = arith.constant 0 : index
    %c0_21 = arith.constant 0 : index
    %c0_22 = arith.constant 0 : index
    %24 = vector.load %arg8[%c0_20, %c0_21, %c0_22] : memref<1x16x16xf32, #tpu.memory_space<vmem>>, vector<1x16x16xf32>
    %c0_23 = arith.constant 0 : index
    %c2 = arith.constant 2 : index
    %c0_24 = arith.constant 0 : index
    %c0_25 = arith.constant 0 : index
    %25 = vector.load %arg4[%c0_23, %c2, %c0_24, %c0_25] : memref<1x4x16x16xf32, #tpu.memory_space<vmem>>, vector<1x1x16x16xf32>
    %26 = vector.shape_cast %25 : vector<1x1x16x16xf32> to vector<1x16x16xf32>
    %c2_i32 = arith.constant 2 : i32
    %27 = arith.addi %3, %c2_i32 : i32
    %28 = arith.index_cast %27 : i32 to index
    %29 = memref.load %arg2[%28] : memref<4xf32, #tpu.memory_space<smem>>
    %30 = vector.broadcast %29 : f32 to vector<1x16x16xf32>
    %31 = arith.mulf %26, %30 : vector<1x16x16xf32>
    %32 = arith.addf %24, %31 : vector<1x16x16xf32>
    %c0_26 = arith.constant 0 : index
    %c0_27 = arith.constant 0 : index
    %c0_28 = arith.constant 0 : index
    %33 = vector.load %arg8[%c0_26, %c0_27, %c0_28] : memref<1x16x16xf32, #tpu.memory_space<vmem>>, vector<1x16x16xf32>
    tpu.vector_store %arg8[%c0_26, %c0_27, %c0_28], %32 {strides = array<i32>} : memref<1x16x16xf32, #tpu.memory_space<vmem>>, vector<1x16x16xf32>,
    %c0_29 = arith.constant 0 : index
    %c0_30 = arith.constant 0 : index
    %c0_31 = arith.constant 0 : index
    %34 = vector.load %arg8[%c0_29, %c0_30, %c0_31] : memref<1x16x16xf32, #tpu.memory_space<vmem>>, vector<1x16x16xf32>
    %c0_32 = arith.constant 0 : index
    %c3 = arith.constant 3 : index
    %c0_33 = arith.constant 0 : index
    %c0_34 = arith.constant 0 : index
    %35 = vector.load %arg4[%c0_32, %c3, %c0_33, %c0_34] : memref<1x4x16x16xf32, #tpu.memory_space<vmem>>, vector<1x1x16x16xf32>
    %36 = vector.shape_cast %35 : vector<1x1x16x16xf32> to vector<1x16x16xf32>
    %c3_i32 = arith.constant 3 : i32
    %37 = arith.addi %3, %c3_i32 : i32
    %38 = arith.index_cast %37 : i32 to index
    %39 = memref.load %arg2[%38] : memref<4xf32, #tpu.memory_space<smem>>
    %40 = vector.broadcast %39 : f32 to vector<1x16x16xf32>
    %41 = arith.mulf %36, %40 : vector<1x16x16xf32>
    %42 = arith.addf %34, %41 : vector<1x16x16xf32>
    %c0_35 = arith.constant 0 : index
    %c0_36 = arith.constant 0 : index
    %c0_37 = arith.constant 0 : index
    %43 = vector.load %arg8[%c0_35, %c0_36, %c0_37] : memref<1x16x16xf32, #tpu.memory_space<vmem>>, vector<1x16x16xf32>
    tpu.vector_store %arg8[%c0_35, %c0_36, %c0_37], %42 {strides = array<i32>} : memref<1x16x16xf32, #tpu.memory_space<vmem>>, vector<1x16x16xf32>,
    %c0_i32_38 = arith.constant 0 : i32
    %44 = arith.cmpi eq, %arg1, %c0_i32_38 : i32
    %45 = arith.extui %44 : i1 to i32
    %c0_i32_39 = arith.constant 0 : i32
    %46 = arith.cmpi ne, %45, %c0_i32_39 : i32
    scf.if %46 {
      %c0_40 = arith.constant 0 : index
      %c0_41 = arith.constant 0 : index
      %47 = vector.load %arg5[%c0_40, %c0_41] : memref<32x16xf32, #tpu.memory_space<vmem>>, vector<32x16xf32>
      %c0_42 = arith.constant 0 : index
      %c0_43 = arith.constant 0 : index
      %48 = vector.load %arg6[%c0_42, %c0_43] : memref<16x128xf32, #tpu.memory_space<vmem>>, vector<16x128xf32>
      %c0_44 = arith.constant 0 : index
      %49 = memref.load %arg3[%c0_44] : memref<1xf32, #tpu.memory_space<smem>>
      %c0_i32_45 = arith.constant 0 : i32
      %50 = arith.index_cast %c0_i32_45 : i32 to index
      %c0_46 = arith.constant 0 : index
      %c0_47 = arith.constant 0 : index
      %51 = vector.load %arg8[%50, %c0_46, %c0_47] : memref<1x16x16xf32, #tpu.memory_space<vmem>>, vector<1x16x16xf32>
      %52 = vector.shape_cast %51 : vector<1x16x16xf32> to vector<16x16xf32>
      %53 = vector.broadcast %49 : f32 to vector<16x16xf32>
      %54 = arith.addf %52, %53 : vector<16x16xf32>
      %cst = arith.constant dense<0.000000e+00> : vector<16x128xf32>
      %55 = tpu.matmul %54, %48, %cst {dimension_numbers = #tpu.dot_dimension_numbers<[1], [0], [0], [1], [0, 0, 1, 1], [], []>} : vector<16x16xf32>, vector<16x128xf32>, vector<16x128xf32> -> vector<16x128xf32>
      %cst_48 = arith.constant dense<0.000000e+00> : vector<32x128xf32>
      %56 = tpu.matmul %47, %55, %cst_48 {dimension_numbers = #tpu.dot_dimension_numbers<[1], [0], [0], [1], [0, 0, 1, 1], [], []>} : vector<32x16xf32>, vector<16x128xf32>, vector<32x128xf32> -> vector<32x128xf32>
      %57 = arith.index_cast %c0_i32_45 : i32 to index
      %c0_49 = arith.constant 0 : index
      %c0_50 = arith.constant 0 : index
      %58 = vector.load %arg7[%57, %c0_49, %c0_50] : memref<1x32x128xf32, #tpu.memory_space<vmem>>, vector<1x32x128xf32>
      %59 = vector.shape_cast %58 : vector<1x32x128xf32> to vector<32x128xf32>
      %60 = vector.shape_cast %56 : vector<32x128xf32> to vector<1x32x128xf32>
      tpu.vector_store %arg7[%57, %c0_49, %c0_50], %60 {strides = array<i32>} : memref<1x32x128xf32, #tpu.memory_space<vmem>>, vector<1x32x128xf32>,
      %c1_i32_51 = arith.constant 1 : i32
    } else {
    }
    return
  }
  func.func @transform_0(%arg0: i32, %arg1: i32, %arg2: memref<4xf32, #tpu.memory_space<smem>>, %arg3: memref<1xf32, #tpu.memory_space<smem>>) -> (i32, i32, i32, i32) {
    %c0_i32 = arith.constant 0 : i32
    %c0_i32_0 = arith.constant 0 : i32
    %c0_i32_1 = arith.constant 0 : i32
    return %arg0, %arg1, %c0_i32, %c0_i32_0 : i32, i32, i32, i32
  }
  func.func @transform_1(%arg0: i32, %arg1: i32, %arg2: memref<4xf32, #tpu.memory_space<smem>>, %arg3: memref<1xf32, #tpu.memory_space<smem>>) -> (i32, i32) {
    %c0_i32 = arith.constant 0 : i32
    %c0_i32_0 = arith.constant 0 : i32
    %c0_i32_1 = arith.constant 0 : i32
    return %c0_i32, %c0_i32_0 : i32, i32
  }
  func.func @transform_2(%arg0: i32, %arg1: i32, %arg2: memref<4xf32, #tpu.memory_space<smem>>, %arg3: memref<1xf32, #tpu.memory_space<smem>>) -> (i32, i32) {
    %c0_i32 = arith.constant 0 : i32
    %c0_i32_0 = arith.constant 0 : i32
    %c0_i32_1 = arith.constant 0 : i32
    return %c0_i32, %c0_i32_0 : i32, i32
  }
  func.func @transform_3(%arg0: i32, %arg1: i32, %arg2: memref<4xf32, #tpu.memory_space<smem>>, %arg3: memref<1xf32, #tpu.memory_space<smem>>) -> (i32, i32, i32) {
    %c0_i32 = arith.constant 0 : i32
    %c0_i32_0 = arith.constant 0 : i32
    %c0_i32_1 = arith.constant 0 : i32
    return %arg0, %c0_i32, %c0_i32_0 : i32, i32, i32
  }
}

</mosaic_0001>

<llo_original>
// kernel: tpu_custom_call.1
$region0: #{tpu_custom_call.1}
  #allocation0 [shape = 'u32[]', space=smem, size = 0x4, offset = 0x4, fixed_abs, tag = 'smem constant byte address 0x4 - core index']
  #allocation1 [shape = 'u32[144,128]{1,0:T(1,128)}', space=vmem, size = 0x12000, scoped, tag = 'internal scratch']
  #allocation2 [shape = 'f32[1,16,16]{2,1,0:T(8,128)}', space=vmem, size = 0x2000, scoped, tag = 'scratch operand']
  #allocation3 [shape = 's32[1]{0}', space=sflag, size = 0x4, scoped, tag = 'scoped memory for tpu_custom_call.1']
  #allocation4 [shape = 'u8[512]{0}', space=smem, size = 0x200, scoped, tag = 'prefetched SMEM operand 0']
  #allocation5 [shape = 'f32[1]{0:T(128)S(6)}', space=smem, size = 0x200, scoped, tag = 'prefetched SMEM operand 1']
  %s0 = inlined_call_operand.vmem [shape: f32[4], index: 0, kind: input, shape index: {}]
  %s1 = inlined_call_operand.<no memory space> [shape: f32[1], index: 1, kind: input, shape index: {}]
  %s2 = inlined_call_operand.hbm [shape: f32[2,4,16,16], index: 2, kind: input, shape index: {}]
  %s3 = inlined_call_operand.vmem [shape: f32[32,16], index: 3, kind: input, shape index: {}]
  %s4 = inlined_call_operand.vmem [shape: f32[16,128], index: 4, kind: input, shape index: {}]
  %s5 = inlined_call_operand.hbm [shape: f32[2,32,128], index: 5, kind: output, shape index: {}]
  %s6 = sld [smem:[#allocation0]]
  $region57: #{tpu_custom_call.1} parent=0
    _
  %s8 = ssub.s32 1, %s6
  %s9 = scalar_select 0, %s8, %s6
  %s10 = sshll.u32 %s0, 4
  %s11 = int_to_ptr.vmem [resolvable:$true] %s10
  %13 = dma.vmem_to_smem %s11, 16, [#allocation4], [#allocation3]
  %14 = sst [smem:[#allocation5]] %s1
  %15 = dma.done [#allocation3], 16
  %16 = sfence
  $region1: #{tpu_custom_call.1} parent=0
    #allocation6 [shape = 'u8[65536]{0}', space=vmem, size = 0x10000, scoped, tag = 'input window, operand 2']
    #allocation7 [shape = 's32[2]{0}', space=sflag, size = 0x8, scoped, tag = 'scoped memory for tpu_custom_call.1']
    #allocation8 [shape = 's32[2]{0}', space=sflag, size = 0x8, scoped, tag = 'scoped memory for tpu_custom_call.1']
    #allocation9 [shape = 'u8[32768]{0}', space=vmem, size = 0x8000, scoped, tag = 'output window, operand 0']
    %17 = vsyncpa [#allocation7], 0
    %s18 = scalar_lea.sflag [#allocation7], 1
    %19 = vsyncpa %s18, 0
    %20 = vsyncpa [#allocation8], 0
    %s21 = scalar_lea.sflag [#allocation8], 1
    %22 = vsyncpa %s21, 0
    loop: start=0, step=1, limit=4
    $region2: #{tpu_custom_call.1} parent=1 // loop_pre_header
      _
    $region3: #{tpu_custom_call.1} parent=1 // loop_header
      %s24 = sphi 0, %s28
      %p25 = scmp.ge.s32.totalorder %s24, 4
      %s31 = sphi 0, %s43
      %s32 = sphi 0, %s39
      %s33 = sphi 0, %s31
      %s34 = sphi 0, %s32
      %s35 = sphi 0, %s33
      %s36 = sphi 0, %s34
      %s48 = sphi 0, %s50
      %s51 = sphi 0, %s48
      %s52 = sphi 0, %s51
      %s68 = sphi 0, %s52
      %s72 = sphi 0, %s72
      %s74 = sphi 0, %s72
      %s75 = sphi 0, %s74
      %s89 = sphi 0, %s75
      %s93 = sphi 0, %s93
      %s95 = sphi 0, %s93
      %s96 = sphi 0, %s95
      %s110 = sphi 0, %s96
      %s116 = sphi 0, %s118
      %s119 = sphi 0, %s116
      %s120 = sphi 0, %s119
      %s136 = sphi 0, %s120
    $region4: #{tpu_custom_call.1} parent=1 // loop_header_branch
      %27 = sbr.rel (%p25) target = $region8
    $region5: #{tpu_custom_call.1} parent=1 // loop_body
      %s29 = ssub.s32 %s24, 1
      %s30 = ssub.s32 %s24, 2
      %s37 = sadd.s32 1, %s32
      %p38 = scmp.ge.s32.totalorder %s37, 1
      %s39 = scalar_select %p38, 0, %s37
      %s40 = sadd.s32 1, %s31
      %s41 = scalar_select %p38, %s40, %s31
      %p42 = scmp.ge.s32.totalorder %s41, 2
      %s43 = scalar_select %p42, 0, %s41
      %s44 = ssub.s32 %s31, %s43
      %s45 = ssub.s32 %s32, %s39
      %s46 = sor.u32 %s44, %s45
      %p47 = scmp.eq.s32.totalorder %s46, 0
      %s49 = sadd.s32 %s48, 1
      %s50 = scalar_select %p47, %s48, %s49
      %p53 = pneg %p47
      %p54 = scmp.eq.s32.totalorder %s24, 1
      %p55 = por %p53, %p54
      %p56 = scmp.ne.s32.totalorder %s48, %s51
      %p57 = scmp.eq.s32.totalorder %s24, 0
      %p58 = por %p56, %p57
      %p59 = scmp.ne.s32.totalorder %s48, %s51
      %p60 = scmp.eq.s32.totalorder %s29, 1
      %p61 = por %p59, %p60
      %p62 = scmp.ne.s32.totalorder %s51, %s52
      %p63 = scmp.eq.s32.totalorder %s29, 0
      %p64 = por %p62, %p63
      %p65 = scmp.ne.s32.totalorder %s51, %s52
      %p66 = scmp.eq.s32.totalorder %s30, 1
      %p67 = por %p65, %p66
      %p69 = scmp.ne.s32.totalorder %s52, %s68
      %p70 = scmp.eq.s32.totalorder %s30, 0
      %p71 = por %p69, %p70
      %s73 = sadd.s32 %s72, 1
      %p76 = scmp.eq.s32.totalorder %s24, 1
      %p77 = scmp.ne.s32.totalorder %s72, %s74
      %p78 = scmp.eq.s32.totalorder %s24, 0
      %p79 = por %p77, %p78
      %p80 = scmp.ne.s32.totalorder %s72, %s74
      %p81 = scmp.eq.s32.totalorder %s29, 1
      %p82 = por %p80, %p81
      %p83 = scmp.ne.s32.totalorder %s74, %s75
      %p84 = scmp.eq.s32.totalorder %s29, 0
      %p85 = por %p83, %p84
      %p86 = scmp.ne.s32.totalorder %s74, %s75
      %p87 = scmp.eq.s32.totalorder %s30, 1
      %p88 = por %p86, %p87
      %p90 = scmp.ne.s32.totalorder %s75, %s89
      %p91 = scmp.eq.s32.totalorder %s30, 0
      %p92 = por %p90, %p91
      %s94 = sadd.s32 %s93, 1
      %p97 = scmp.eq.s32.totalorder %s24, 1
      %p98 = scmp.ne.s32.totalorder %s93, %s95
      %p99 = scmp.eq.s32.totalorder %s24, 0
      %p100 = por %p98, %p99
      %p101 = scmp.ne.s32.totalorder %s93, %s95
      %p102 = scmp.eq.s32.totalorder %s29, 1
      %p103 = por %p101, %p102
      %p104 = scmp.ne.s32.totalorder %s95, %s96
      %p105 = scmp.eq.s32.totalorder %s29, 0
      %p106 = por %p104, %p105
      %p107 = scmp.ne.s32.totalorder %s95, %s96
      %p108 = scmp.eq.s32.totalorder %s30, 1
      %p109 = por %p107, %p108
      %p111 = scmp.ne.s32.totalorder %s96, %s110
      %p112 = scmp.eq.s32.totalorder %s30, 0
      %p113 = por %p111, %p112
      %s114 = ssub.s32 %s31, %s43
      %p115 = scmp.eq.s32.totalorder %s114, 0
      %s117 = sadd.s32 %s116, 1
      %s118 = scalar_select %p115, %s116, %s117
      %p121 = pneg %p115
      %p122 = scmp.eq.s32.totalorder %s24, 1
      %p123 = por %p121, %p122
      %p124 = scmp.ne.s32.totalorder %s116, %s119
      %p125 = scmp.eq.s32.totalorder %s24, 0
      %p126 = por %p124, %p125
      %p127 = scmp.ne.s32.totalorder %s116, %s119
      %p128 = scmp.eq.s32.totalorder %s29, 1
      %p129 = por %p127, %p128
      %p130 = scmp.ne.s32.totalorder %s119, %s120
      %p131 = scmp.eq.s32.totalorder %s29, 0
      %p132 = por %p130, %p131
      %p133 = scmp.ne.s32.totalorder %s119, %s120
      %p134 = scmp.eq.s32.totalorder %s30, 1
      %p135 = por %p133, %p134
      %p137 = scmp.ne.s32.totalorder %s120, %s136
      %p138 = scmp.eq.s32.totalorder %s30, 0
      %p139 = por %p137, %p138
      %p140 = scmp.le.s32.totalorder 1, %s24
      %p141 = scmp.lt.s32.totalorder %s24, 3
      %p142 = pnand %p140, %p141
      %p143 = pneg %p142
      // Predicated region
      $region9: #{tpu_custom_call.1} parent=5 // pred_check
        _
      $region10: #{tpu_custom_call.1} parent=5 // pred_check_branch
        %145 = sbr.rel (%p142) target = $region12
      $region11: #{tpu_custom_call.1} parent=5 // pred_region
        %s146 = ssub.s32 %s24, 1
        // Predicated region
        $region13: #{tpu_custom_call.1} parent=11 // pred_check
          %p147 = pneg %p85
        $region14: #{tpu_custom_call.1} parent=11 // pred_check_branch
          %149 = sbr.rel (%p147) target = $region16
        $region15: #{tpu_custom_call.1} parent=11 // pred_region
          _
        $region16: #{tpu_custom_call.1} parent=11 // pred_fallthru
          _
        // Predicated region
        $region17: #{tpu_custom_call.1} parent=11 // pred_check
          %p150 = pneg %p106
        $region18: #{tpu_custom_call.1} parent=11 // pred_check_branch
          %152 = sbr.rel (%p150) target = $region20
        $region19: #{tpu_custom_call.1} parent=11 // pred_region
          _
        $region20: #{tpu_custom_call.1} parent=11 // pred_fallthru
          _
      $region12: #{tpu_custom_call.1} parent=5 // pred_fallthru
        _
      %p153 = scmp.lt.s32.totalorder %s24, 2
      // Predicated region
      $region21: #{tpu_custom_call.1} parent=5 // pred_check
        %p154 = pneg %p153
      $region22: #{tpu_custom_call.1} parent=5 // pred_check_branch
        %156 = sbr.rel (%p154) target = $region24
      $region23: #{tpu_custom_call.1} parent=5 // pred_region
        // Predicated region
        $region25: #{tpu_custom_call.1} parent=23 // pred_check
          %p157 = pneg %p58
        $region26: #{tpu_custom_call.1} parent=23 // pred_check_branch
          %159 = sbr.rel (%p157) target = $region28
        $region27: #{tpu_custom_call.1} parent=23 // pred_region
          %s160 = sand.u32 %s48, 1
          %s161 = scalar_lea.sflag [#allocation7], %s160
          %s162 = sand.u32 %s48, 1
          %s163 = smul.addr %s162, 64
          %s164 = scalar_lea.vmem [#allocation6], %s163
          %s165 = smul.u32 4, %s32
          %s167 = ssub.s32 1024, 1024
          %168 = vsyncadd %s161, %s167
          %s169 = smul.addr %s165, 2
          %s170 = smul.addr %s31, 8
          %s171 = sadd.s32 %s169, %s170
          %s172 = smul.addr %s171, 128
          %s173 = scalar_lea.hbm %s2, %s172
          %s174 = sshll.u32 %s164, 4
          %s175 = int_to_ptr.vmem [resolvable:$true] %s174
          %180 = dma.hbm_to_vmem [thread:$0]  %s173, 1024, %s175, %s161, 128, 128, 8
        $region28: #{tpu_custom_call.1} parent=23 // pred_fallthru
          _
      $region24: #{tpu_custom_call.1} parent=5 // pred_fallthru
        _
      %p181 = scmp.le.s32.totalorder 1, %s24
      %p182 = scmp.lt.s32.totalorder %s24, 3
      %p183 = pnand %p181, %p182
      %p184 = pneg %p183
      // Predicated region
      $region29: #{tpu_custom_call.1} parent=5 // pred_check
        _
      $region30: #{tpu_custom_call.1} parent=5 // pred_check_branch
        %186 = sbr.rel (%p183) target = $region32
      $region31: #{tpu_custom_call.1} parent=5 // pred_region
        %s187 = ssub.s32 %s24, 1
        %s188 = sand.u32 %s51, 1
        %s189 = scalar_lea.sflag [#allocation7], %s188
        %s190 = sand.u32 %s51, 1
        %s191 = smul.addr %s190, 64
        %s192 = scalar_lea.vmem [#allocation6], %s191
        // Predicated region
        $region33: #{tpu_custom_call.1} parent=31 // pred_check
          %p193 = pneg %p64
        $region34: #{tpu_custom_call.1} parent=31 // pred_check_branch
          %195 = sbr.rel (%p193) target = $region36
        $region35: #{tpu_custom_call.1} parent=31 // pred_region
          %196 = dma.done %s189, 1024
        $region36: #{tpu_custom_call.1} parent=31 // pred_fallthru
          _
        %s197 = sand.u32 %s51, 1
        %s198 = scalar_lea.sflag [#allocation7], %s197
        %s199 = sand.u32 %s51, 1
        %s200 = smul.addr %s199, 64
        %s201 = scalar_lea.vmem [#allocation6], %s200
        %p202 = pneg %p64
        %p203 = pneg %p61
        %p204 = pneg %p85
        %p205 = pneg %p82
        %p206 = pneg %p106
        %p207 = pneg %p103
        %p208 = pneg %p132
        %p209 = pneg %p129
        %s210 = sand.u32 %s119, 1
        %s211 = scalar_lea.sflag [#allocation8], %s210
        %s212 = sand.u32 %s119, 1
        %s213 = smul.addr %s212, 32
        %s214 = scalar_lea.vmem [#allocation9], %s213
        %s215 = smul.u32 4, %s34
        %p216 = scmp.eq.s32.totalorder %s34, 0
        // Predicated region
        $region37: #{tpu_custom_call.1} parent=31 // pred_check
          %p217 = pneg %p216
        $region38: #{tpu_custom_call.1} parent=31 // pred_check_branch
          %219 = sbr.rel (%p217) target = $region40
        $region39: #{tpu_custom_call.1} parent=31 // pred_region
          %vm220 = vcmask 130048
          %221 = vst.msk [vmem:[#allocation2] sm:$0xff] %vm220, 0.0
          %222 = vst.msk [vmem:[#allocation2 + $0x8] sm:$0xff] %vm220, 0.0
        $region40: #{tpu_custom_call.1} parent=31 // pred_fallthru
          _
        %s223 = smul.u32 %s34, 4
        %v224 = vld [vmem:[#allocation2] sm:$0xff]
        %v225 = vld [vmem:[#allocation2 + $0x8] sm:$0xff]
        %v226 = vld [vmem:[%s192] sm:$0xff]
        %v227 = vld [vmem:[%s192 + $0x8] sm:$0xff]
        %s228 = sld [smem:[#allocation4 + %s223]]
        %v229 = vstv %s228
        %v230 = vmul.f32 %v226, %v229
        %v231 = vmul.f32 %v227, %v229
        %v232 = vadd.f32 %v224, %v230
        %v233 = vadd.f32 %v225, %v231
        %vm234 = vcmask 130048
        %235 = vst.msk [vmem:[#allocation2] sm:$0xff] %vm234, %v232
        %236 = vst.msk [vmem:[#allocation2 + $0x8] sm:$0xff] %vm234, %v233
        %v237 = vld [vmem:[#allocation2] sm:$0xff]
        %v238 = vld [vmem:[#allocation2 + $0x8] sm:$0xff]
        %s239 = scalar_lea.vmem %s192, 16 [#allocation6]
        %v240 = vld [vmem:[%s239] sm:$0xff]
        %v241 = vld [vmem:[%s239 + $0x8] sm:$0xff]
        %s242 = sadd.s32 %s223, 1
        %s243 = sld [smem:[#allocation4 + %s242]]
        %v244 = vstv %s243
        %v245 = vmul.f32 %v240, %v244
        %v246 = vmul.f32 %v241, %v244
        %v247 = vadd.f32 %v237, %v245
        %v248 = vadd.f32 %v238, %v246
        %249 = vst.msk [vmem:[#allocation2] sm:$0xff] %vm234, %v247
        %250 = vst.msk [vmem:[#allocation2 + $0x8] sm:$0xff] %vm234, %v248
        %v251 = vld [vmem:[#allocation2] sm:$0xff]
        %v252 = vld [vmem:[#allocation2 + $0x8] sm:$0xff]
        %s253 = scalar_lea.vmem %s192, 32 [#allocation6]
        %v254 = vld [vmem:[%s253] sm:$0xff]
        %v255 = vld [vmem:[%s253 + $0x8] sm:$0xff]
        %s256 = sadd.s32 %s223, 2
        %s257 = sld [smem:[#allocation4 + %s256]]
        %v258 = vstv %s257
        %v259 = vmul.f32 %v254, %v258
        %v260 = vmul.f32 %v255, %v258
        %v261 = vadd.f32 %v251, %v259
        %v262 = vadd.f32 %v252, %v260
        %263 = vst.msk [vmem:[#allocation2] sm:$0xff] %vm234, %v261
        %264 = vst.msk [vmem:[#allocation2 + $0x8] sm:$0xff] %vm234, %v262
        %v265 = vld [vmem:[#allocation2] sm:$0xff]
        %v266 = vld [vmem:[#allocation2 + $0x8] sm:$0xff]
        %s267 = scalar_lea.vmem %s192, 48 [#allocation6]
        %v268 = vld [vmem:[%s267] sm:$0xff]
        %v269 = vld [vmem:[%s267 + $0x8] sm:$0xff]
        %s270 = sadd.s32 %s223, 3
        %s271 = sld [smem:[#allocation4 + %s270]]
        %v272 = vstv %s271
        %v273 = vmul.f32 %v268, %v272
        %v274 = vmul.f32 %v269, %v272
        %v275 = vadd.f32 %v265, %v273
        %v276 = vadd.f32 %v266, %v274
        %277 = vst.msk [vmem:[#allocation2] sm:$0xff] %vm234, %v275
        %278 = vst.msk [vmem:[#allocation2 + $0x8] sm:$0xff] %vm234, %v276
        // Predicated region
        $region41: #{tpu_custom_call.1} parent=31 // pred_check
          %p279 = pneg %p216
        $region42: #{tpu_custom_call.1} parent=31 // pred_check_branch
          %281 = sbr.rel (%p279) target = $region44
        $region43: #{tpu_custom_call.1} parent=31 // pred_region
          %v282 = vld [vmem:[%s3] sm:$0xff]
          %v283 = vld [vmem:[%s3 + $0x8] sm:$0xff]
          %v284 = vld [vmem:[%s3 + $0x10] sm:$0xff]
          %v285 = vld [vmem:[%s3 + $0x18] sm:$0xff]
          %v286 = vld [vmem:[%s4] sm:$0xff]
          %v287 = vld [vmem:[%s4 + $0x8] sm:$0xff]
          %s288 = sld [smem:[#allocation5]]
          %v289 = vld [vmem:[#allocation2] sm:$0xff]
          %v290 = vld [vmem:[#allocation2 + $0x8] sm:$0xff]
          %v291 = vstv %s288
          %v292 = vadd.f32 %v289, %v291
          %v293 = vadd.f32 %v290, %v291
          %v295 = vsel %vm234, %v292, 0
          %v298 = vsel %vm234, %v293, 0
          %300 = vmatprep.subr.mxu0 0.0
          %301 = vmatpush1.msra.mxu0 %v286
          %302 = vmatprep.subr.mxu0 0.0
          %303 = vmatpush1.msra.mxu0 %v287
          %304 = vmatprep.subr.mxu0 0.0
          %305 = vmatpush1.msra.mxu0 0.0
          %306 = vmatprep.subr.mxu0 0.0
          %307 = vmatpush1.msra.mxu0 0.0
          %308 = vmatprep.subr.mxu0 0.0
          %309 = vmatpush1.msra.mxu0 0.0
          %310 = vmatprep.subr.mxu0 0.0
          %311 = vmatpush1.msra.mxu0 0.0
          %312 = vmatprep.subr.mxu0 0.0
          %313 = vmatpush1.msra.mxu0 0.0
          %314 = vmatprep.subr.mxu0 0.0
          %315 = vmatpush1.msra.mxu0 0.0
          %316 = vmatprep.subr.mxu0 0.0
          %317 = vmatpush1.msra.mxu0 0.0
          %318 = vmatprep.subr.mxu0 0.0
          %319 = vmatpush1.msra.mxu0 0.0
          %320 = vmatprep.subr.mxu0 0.0
          %321 = vmatpush1.msra.mxu0 0.0
          %322 = vmatprep.subr.mxu0 0.0
          %323 = vmatpush1.msra.mxu0 0.0
          %324 = vmatprep.subr.mxu0 0.0
          %325 = vmatpush1.msra.mxu0 0.0
          %326 = vmatprep.subr.mxu0 0.0
          %327 = vmatpush1.msra.mxu0 0.0
          %328 = vmatprep.subr.mxu0 0.0
          %329 = vmatpush1.msra.mxu0 0.0
          %330 = vmatprep.subr.mxu0 0.0
          %331 = vmatpush1.msra.mxu0 0.0
          %332 = vmatprep.subr.mxu0 0.0
          %333 = vmatpush1.msra.mxu0 0.0
          %334 = vmatprep.subr.mxu0 0.0
          %335 = vmatpush1.msra.mxu0 0.0
          %336 = vmatprep.subr.mxu0 0.0
          %337 = vmatpush1.msra.mxu0 0.0
          %338 = vmatprep.subr.mxu0 0.0
          %339 = vmatpush1.msra.mxu0 0.0
          %340 = vmatprep.subr.mxu0 0.0
          %341 = vmatpush1.msra.mxu0 0.0
          %342 = vmatprep.subr.mxu0 0.0
          %343 = vmatpush1.msra.mxu0 0.0
          %344 = vmatprep.subr.mxu0 0.0
          %345 = vmatpush1.msra.mxu0 0.0
          %346 = vmatprep.subr.mxu0 0.0
          %347 = vmatpush1.msra.mxu0 0.0
          %348 = vmatprep.subr.mxu0 0.0
          %349 = vmatpush1.msra.mxu0 0.0
          %350 = vmatprep.subr.mxu0 0.0
          %351 = vmatpush1.msra.mxu0 0.0
          %352 = vmatprep.subr.mxu0 0.0
          %353 = vmatpush1.msra.mxu0 0.0
          %354 = vmatprep.subr.mxu0 0.0
          %355 = vmatpush1.msra.mxu0 0.0
          %356 = vmatprep.subr.mxu0 0.0
          %357 = vmatpush1.msra.mxu0 0.0
          %358 = vmatprep.subr.mxu0 0.0
          %359 = vmatpush1.msra.mxu0 0.0
          %360 = vmatprep.subr.mxu0 0.0
          %361 = vmatpush1.msra.mxu0 0.0
          %362 = vmatprep.subr.mxu0 0.0
          %363 = vmatpush1.msra.mxu0 0.0
          %364 = vmatprep.mubr.f32.mxu0 0.0
          %365 = vmatmul.mubr.f32.gmra.mrb[0].mxu0 %v295
          %v366 = vpop.f32.mrb[0].mxu0
          %v367 = vadd.f32 0.0, %v366
          %v368 = vpop.f32.mrb[0].mxu0
          %369 = vmatprep.mubr.f32.mxu0 0.0
          %370 = vmatmul.mubr.f32.gmra.mrb[0].mxu0 %v298
          %v371 = vpop.f32.mrb[0].mxu0
          %v372 = vadd.f32 0.0, %v371
          %v373 = vpop.f32.mrb[0].mxu0
          %374 = vdwg.mxu0
          %v376 = vsel %vm234, %v282, 0
          %v379 = vsel %vm234, %v283, 0
          %v382 = vsel %vm234, %v284, 0
          %v385 = vsel %vm234, %v285, 0
          %387 = vmatprep.subr.mxu0 0.0
          %388 = vmatpush1.msra.mxu0 %v367
          %389 = vmatprep.subr.mxu0 0.0
          %390 = vmatpush1.msra.mxu0 %v372
          %391 = vmatprep.subr.mxu0 0.0
          %392 = vmatpush1.msra.mxu0 0.0
          %393 = vmatprep.subr.mxu0 0.0
          %394 = vmatpush1.msra.mxu0 0.0
          %395 = vmatprep.subr.mxu0 0.0
          %396 = vmatpush1.msra.mxu0 0.0
          %397 = vmatprep.subr.mxu0 0.0
          %398 = vmatpush1.msra.mxu0 0.0
          %399 = vmatprep.subr.mxu0 0.0
          %400 = vmatpush1.msra.mxu0 0.0
          %401 = vmatprep.subr.mxu0 0.0
          %402 = vmatpush1.msra.mxu0 0.0
          %403 = vmatprep.subr.mxu0 0.0
          %404 = vmatpush1.msra.mxu0 0.0
          %405 = vmatprep.subr.mxu0 0.0
          %406 = vmatpush1.msra.mxu0 0.0
          %407 = vmatprep.subr.mxu0 0.0
          %408 = vmatpush1.msra.mxu0 0.0
          %409 = vmatprep.subr.mxu0 0.0
          %410 = vmatpush1.msra.mxu0 0.0
          %411 = vmatprep.subr.mxu0 0.0
          %412 = vmatpush1.msra.mxu0 0.0
          %413 = vmatprep.subr.mxu0 0.0
          %414 = vmatpush1.msra.mxu0 0.0
          %415 = vmatprep.subr.mxu0 0.0
          %416 = vmatpush1.msra.mxu0 0.0
          %417 = vmatprep.subr.mxu0 0.0
          %418 = vmatpush1.msra.mxu0 0.0
          %419 = vmatprep.subr.mxu0 0.0
          %420 = vmatpush1.msra.mxu0 0.0
          %421 = vmatprep.subr.mxu0 0.0
          %422 = vmatpush1.msra.mxu0 0.0
          %423 = vmatprep.subr.mxu0 0.0
          %424 = vmatpush1.msra.mxu0 0.0
          %425 = vmatprep.subr.mxu0 0.0
          %426 = vmatpush1.msra.mxu0 0.0
          %427 = vmatprep.subr.mxu0 0.0
          %428 = vmatpush1.msra.mxu0 0.0
          %429 = vmatprep.subr.mxu0 0.0
          %430 = vmatpush1.msra.mxu0 0.0
          %431 = vmatprep.subr.mxu0 0.0
          %432 = vmatpush1.msra.mxu0 0.0
          %433 = vmatprep.subr.mxu0 0.0
          %434 = vmatpush1.msra.mxu0 0.0
          %435 = vmatprep.subr.mxu0 0.0
          %436 = vmatpush1.msra.mxu0 0.0
          %437 = vmatprep.subr.mxu0 0.0
          %438 = vmatpush1.msra.mxu0 0.0
          %439 = vmatprep.subr.mxu0 0.0
          %440 = vmatpush1.msra.mxu0 0.0
          %441 = vmatprep.subr.mxu0 0.0
          %442 = vmatpush1.msra.mxu0 0.0
          %443 = vmatprep.subr.mxu0 0.0
          %444 = vmatpush1.msra.mxu0 0.0
          %445 = vmatprep.subr.mxu0 0.0
          %446 = vmatpush1.msra.mxu0 0.0
          %447 = vmatprep.subr.mxu0 0.0
          %448 = vmatpush1.msra.mxu0 0.0
          %449 = vmatprep.subr.mxu0 0.0
          %450 = vmatpush1.msra.mxu0 0.0
          %451 = vmatprep.mubr.f32.mxu0 0.0
          %452 = vmatmul.mubr.f32.gmra.mrb[0].mxu0 %v376
          %v453 = vpop.f32.mrb[0].mxu0
          %v454 = vadd.f32 0.0, %v453
          %v455 = vpop.f32.mrb[0].mxu0
          %456 = vmatprep.mubr.f32.mxu0 0.0
          %457 = vmatmul.mubr.f32.gmra.mrb[0].mxu0 %v379
          %v458 = vpop.f32.mrb[0].mxu0
          %v459 = vadd.f32 0.0, %v458
          %v460 = vpop.f32.mrb[0].mxu0
          %461 = vmatprep.mubr.f32.mxu0 0.0
          %462 = vmatmul.mubr.f32.gmra.mrb[0].mxu0 %v382
          %v463 = vpop.f32.mrb[0].mxu0
          %v464 = vadd.f32 0.0, %v463
          %v465 = vpop.f32.mrb[0].mxu0
          %466 = vmatprep.mubr.f32.mxu0 0.0
          %467 = vmatmul.mubr.f32.gmra.mrb[0].mxu0 %v385
          %v468 = vpop.f32.mrb[0].mxu0
          %v469 = vadd.f32 0.0, %v468
          %v470 = vpop.f32.mrb[0].mxu0
          %471 = vdwg.mxu0
          %472 = vst [vmem:[%s214] sm:$0xff] %v454
          %473 = vst [vmem:[%s214 + $0x8] sm:$0xff] %v459
          %474 = vst [vmem:[%s214 + $0x10] sm:$0xff] %v464
          %475 = vst [vmem:[%s214 + $0x18] sm:$0xff] %v469
        $region44: #{tpu_custom_call.1} parent=31 // pred_fallthru
          _
        %s476 = sand.u32 %s119, 1
        %s477 = scalar_lea.sflag [#allocation8], %s476
        %s478 = sand.u32 %s119, 1
        %s479 = smul.addr %s478, 32
        %s480 = scalar_lea.vmem [#allocation9], %s479
        // Predicated region
        $region45: #{tpu_custom_call.1} parent=31 // pred_check
          %p481 = pneg %p129
        $region46: #{tpu_custom_call.1} parent=31 // pred_check_branch
          %483 = sbr.rel (%p481) target = $region48
        $region47: #{tpu_custom_call.1} parent=31 // pred_region
          %s485 = ssub.s32 512, 512
          %486 = vsyncadd %s477, %s485
          %s487 = smul.addr %s33, 4
          %s488 = smul.addr %s487, 128
          %s489 = scalar_lea.hbm %s5, %s488
          %s490 = sshll.u32 %s480, 4
          %s491 = int_to_ptr.vmem [resolvable:$true] %s490
          %496 = dma.vmem_to_hbm [thread:$0]  %s491, 512, %s489, %s477, 128, 128, 8
        $region48: #{tpu_custom_call.1} parent=31 // pred_fallthru
          _
      $region32: #{tpu_custom_call.1} parent=5 // pred_fallthru
        _
      %p497 = scmp.le.s32.totalorder 2, %s24
      // Predicated region
      $region49: #{tpu_custom_call.1} parent=5 // pred_check
        %p498 = pneg %p497
      $region50: #{tpu_custom_call.1} parent=5 // pred_check_branch
        %500 = sbr.rel (%p498) target = $region52
      $region51: #{tpu_custom_call.1} parent=5 // pred_region
        %s501 = ssub.s32 %s24, 2
        // Predicated region
        $region53: #{tpu_custom_call.1} parent=51 // pred_check
          %p502 = pneg %p135
        $region54: #{tpu_custom_call.1} parent=51 // pred_check_branch
          %504 = sbr.rel (%p502) target = $region56
        $region55: #{tpu_custom_call.1} parent=51 // pred_region
          %s505 = sand.u32 %s120, 1
          %s506 = scalar_lea.sflag [#allocation8], %s505
          %s507 = sand.u32 %s120, 1
          %s508 = smul.addr %s507, 32
          %s509 = scalar_lea.vmem [#allocation9], %s508
          %510 = dma.done %s506, 512
        $region56: #{tpu_custom_call.1} parent=51 // pred_fallthru
          _
      $region52: #{tpu_custom_call.1} parent=5 // pred_fallthru
        _
    $region6: #{tpu_custom_call.1} parent=1 // loop_footer
      %s28 = sadd.s32 1, %s24
    $region7: #{tpu_custom_call.1} parent=1 // loop_footer_branch
      %23 = sbr.rel target = $region3
    $region8: #{tpu_custom_call.1} parent=1 // loop_exit
      _
    %511 = vsyncpa [#allocation7], 1
    %s512 = scalar_lea.sflag [#allocation7], 1
    %513 = vsyncpa %s512, 1
    %514 = vsyncpa [#allocation8], 1
    %s515 = scalar_lea.sflag [#allocation8], 1
    %516 = vsyncpa %s515, 1

</llo_original>
